<compile_context>
chip_gen: v6e
topology: v6e:2x2x1
jax: 0.10.0
libtpu: 0.0.40
codegen_flags: <defaults>
</compile_context>

<pallas_src>
import jax
import jax.numpy as jnp
from jax.experimental import pallas as pl
from jax.experimental.pallas import tpu as pltpu


# ----------------------------------------------------------------------------
# Pallas copy kernel: direct HBM -> HBM, K concurrent chunk DMAs.
# ----------------------------------------------------------------------------

_MIN_PALLAS_BYTES = 1 << 20   # below this, an XLA-native copy wins (dispatch cost)
_MAX_CHUNKS = 8               # concurrent outstanding DMAs for large copies
_ROW_ALIGN = 8                # keep chunk starts sublane-aligned


def _chunk_bounds(n_rows: int, max_chunks: int, align: int = _ROW_ALIGN):
    """Static (start, size) bounds along the leading axis, starts 8-aligned."""
    if n_rows <= align or max_chunks <= 1:
        return ((0, n_rows),)
    per = -(-n_rows // max_chunks)          # ceil(n_rows / max_chunks)
    per = -(-per // align) * align          # round up to multiple of `align`
    bounds = []
    start = 0
    while start < n_rows:
        size = min(per, n_rows - start)
        bounds.append((start, size))
        start += size
    return tuple(bounds)


def _make_copy_kernel(chunks):
    """Build a kernel issuing one HBM->HBM DMA per (static) chunk, all
    concurrent: every cp.start() is issued before the first cp.wait()."""

    def kernel(src_hbm, dst_hbm, sems):
        copies = []
        if chunks is None:                  # 0-d / unsliceable: single full DMA
            cp = pltpu.make_async_copy(src_hbm, dst_hbm, sems.at[0])
            cp.start()
            copies.append(cp)
        else:
            for k, (start, size) in enumerate(chunks):
                cp = pltpu.make_async_copy(
                    src_hbm.at[pl.ds(start, size)],
                    dst_hbm.at[pl.ds(start, size)],
                    sems.at[k],
                )
                cp.start()                  # issue all DMAs first (concurrent)
                copies.append(cp)
        for cp in copies:                   # then drain them all
            cp.wait()

    return kernel


def _identity_copy_pallas_impl(obs: jax.Array) -> jax.Array:
    """Fresh buffer holding `obs` via concurrent direct HBM->HBM DMAs."""
    if obs.ndim == 0:
        chunks, n_sems = None, 1
    else:
        chunks = _chunk_bounds(obs.shape[0], _MAX_CHUNKS)
        n_sems = len(chunks)

    # Both operands stay in HBM (pl.ANY): no VMEM staging, no tiling rules,
    # shape/dtype agnostic, identical behavior on v5e / v6e / v7x.
    # (Megacore sharding via core_map is possible on v7x but the concurrent
    #  chunk DMAs already keep the DMA engines busy for this pure copy.)
    return pl.pallas_call(
        _make_copy_kernel(chunks),
        out_shape=jax.ShapeDtypeStruct(obs.shape, obs.dtype),
        in_specs=[pl.BlockSpec(memory_space=pl.ANY)],
        out_specs=pl.BlockSpec(memory_space=pl.ANY),
        scratch_shapes=[pltpu.SemaphoreType.DMA((n_sems,))],
        cost_estimate=pl.CostEstimate(
            flops=0, transcendentals=0, bytes_accessed=2 * obs.nbytes),
    )(obs)


# custom_vjp: the copy is an identity, so the backward pass is the identity.
@jax.custom_vjp
def _identity_copy_pallas(obs: jax.Array) -> jax.Array:
    return _identity_copy_pallas_impl(obs)


def _identity_copy_pallas_fwd(obs):
    return _identity_copy_pallas_impl(obs), None


def _identity_copy_pallas_bwd(_, g):
    return (g,)


_identity_copy_pallas.defvjp(_identity_copy_pallas_fwd, _identity_copy_pallas_bwd)


# ----------------------------------------------------------------------------
# Public forward (mirrors IdentityEncoder.forward).
# ----------------------------------------------------------------------------

def identity_encoder_forward(obs: jax.Array, detach: bool = False,
                             copy: bool = False, *,
                             force_pallas_copy: bool = False) -> jax.Array:
    """JAX/Pallas implementation of IdentityEncoder.forward.

    copy=False (default): exact PyTorch semantics — returns `obs` with zero
    data movement and zero dispatch cost.
    copy=True: returns a freshly materialized buffer.  Tiny arrays use an
    XLA-native copy (fusable / overlappable); large arrays use the concurrent
    HBM->HBM DMA Pallas kernel.  On v5e (slowest HBM) prefer copy=False.
    """
    if copy and obs.size > 0:
        if force_pallas_copy or obs.nbytes >= _MIN_PALLAS_BYTES:
            out = _identity_copy_pallas(obs)
        else:
            out = jnp.copy(obs)   # XLA-native: kernel-launch cost not worth it
    else:
        out = obs                 # pure identity: the best kernel is no kernel
    if detach:
        out = jax.lax.stop_gradient(out)
    return out


class IdentityEncoderJAX:
    """Mirror of the PyTorch IdentityEncoder (no parameters)."""

    def __init__(self, obs_shape, feature_dim, num_layers, num_filters, *args):
        assert len(obs_shape) == 1
        self.feature_dim = obs_shape[0]

    def __call__(self, obs, detach=False, copy=False, **kw):
        return identity_encoder_forward(obs, detach=detach, copy=copy, **kw)

    def copy_conv_weights_from(self, source):
        pass  # no conv weights

    def log(self, L, step, log_freq):
        pass  # no-op


if __name__ == "__main__":
    key = jax.random.PRNGKey(0)
    k0, k1 = jax.random.split(key)

    batch, feature_dim = 2, 32                      # obs_shape = (feature_dim,)
    obs = jax.random.normal(k0, (batch, feature_dim), dtype=jnp.float32)

    encoder = IdentityEncoderJAX((feature_dim,), feature_dim=50,
                                 num_layers=2, num_filters=32)

    # 1) Default (zero-copy) path — matches PyTorch semantics exactly.
    out_fast = encoder(obs)
    jax.block_until_ready(out_fast)
    assert out_fast.shape == obs.shape and out_fast.dtype == obs.dtype
    assert bool(jnp.all(out_fast == obs))

    # 2) copy=True on a tiny array — short-circuits to an XLA-native copy.
    out_small_copy = encoder(obs, detach=True, copy=True)
    jax.block_until_ready(out_small_copy)
    assert bool(jnp.all(out_small_copy == obs))

    # 3) Pallas copy kernel path (forced) — concurrent HBM->HBM chunk DMAs.
    obs_big = jax.random.normal(k1, (64, 512), dtype=jnp.float32)
    out_copy = encoder(obs_big, detach=True, copy=True, force_pallas_copy=True)
    jax.block_until_ready(out_copy)
    assert out_copy.shape == obs_big.shape and out_copy.dtype == obs_big.dtype
    assert bool(jnp.all(out_copy == obs_big))

    # 4) Autodiff through the Pallas copy path (custom_vjp backward = identity).
    grad = jax.grad(
        lambda x: jnp.sum(identity_encoder_forward(x, copy=True,
                                                   force_pallas_copy=True))
    )(obs_big)
    jax.block_until_ready(grad)
    assert bool(jnp.all(grad == jnp.ones_like(obs_big)))

    print("KERNEL_OK")
</pallas_src>

<mosaic_0001>
module attributes {stable_mosaic.version = 11 : i64} {
  func.func @kernel(%arg0: memref<64x512xf32, #tpu.memory_space<any>>, %arg1: memref<64x512xf32, #tpu.memory_space<any>>, %arg2: memref<8x!tpu.dma_semaphore, #tpu.memory_space<semaphore_mem>>) attributes {dimension_semantics = [], scalar_prefetch = 0 : i64, scratch_operands = 1 : i64, tpu.core_type = #tpu.core_type<tc>} {
    %c0_i32 = arith.constant 0 : i32
    %c0_i32_0 = arith.constant 0 : i32
    %c0_i32_1 = arith.constant 0 : i32
    %0 = tpu.memref_slice %arg0[%c0_i32_0, %c0_i32_1] : memref<64x512xf32, #tpu.memory_space<any>> -> memref<8x512xf32, #tpu.memory_space<any>>
    %c0_i32_2 = arith.constant 0 : i32
    %c0_i32_3 = arith.constant 0 : i32
    %1 = tpu.memref_slice %arg1[%c0_i32_2, %c0_i32_3] : memref<64x512xf32, #tpu.memory_space<any>> -> memref<8x512xf32, #tpu.memory_space<any>>
    %2 = tpu.memref_slice %arg2[%c0_i32] : memref<8x!tpu.dma_semaphore, #tpu.memory_space<semaphore_mem>> -> memref<1x!tpu.dma_semaphore, #tpu.memory_space<semaphore_mem>>
    %3 = tpu.memref_squeeze %2 : memref<1x!tpu.dma_semaphore, #tpu.memory_space<semaphore_mem>> -> memref<!tpu.dma_semaphore, #tpu.memory_space<semaphore_mem>>
    tpu.enqueue_dma source(%0 : memref<8x512xf32, #tpu.memory_space<any>>) target(%1 : memref<8x512xf32, #tpu.memory_space<any>>) target_semaphore(%3 : memref<!tpu.dma_semaphore, #tpu.memory_space<semaphore_mem>>)
    %c1_i32 = arith.constant 1 : i32
    %c8_i32 = arith.constant 8 : i32
    %c0_i32_4 = arith.constant 0 : i32
    %4 = tpu.memref_slice %arg0[%c8_i32, %c0_i32_4] : memref<64x512xf32, #tpu.memory_space<any>> -> memref<8x512xf32, #tpu.memory_space<any>>
    %c8_i32_5 = arith.constant 8 : i32
    %c0_i32_6 = arith.constant 0 : i32
    %5 = tpu.memref_slice %arg1[%c8_i32_5, %c0_i32_6] : memref<64x512xf32, #tpu.memory_space<any>> -> memref<8x512xf32, #tpu.memory_space<any>>
    %6 = tpu.memref_slice %arg2[%c1_i32] : memref<8x!tpu.dma_semaphore, #tpu.memory_space<semaphore_mem>> -> memref<1x!tpu.dma_semaphore, #tpu.memory_space<semaphore_mem>>
    %7 = tpu.memref_squeeze %6 : memref<1x!tpu.dma_semaphore, #tpu.memory_space<semaphore_mem>> -> memref<!tpu.dma_semaphore, #tpu.memory_space<semaphore_mem>>
    tpu.enqueue_dma source(%4 : memref<8x512xf32, #tpu.memory_space<any>>) target(%5 : memref<8x512xf32, #tpu.memory_space<any>>) target_semaphore(%7 : memref<!tpu.dma_semaphore, #tpu.memory_space<semaphore_mem>>)
    %c2_i32 = arith.constant 2 : i32
    %c16_i32 = arith.constant 16 : i32
    %c0_i32_7 = arith.constant 0 : i32
    %8 = tpu.memref_slice %arg0[%c16_i32, %c0_i32_7] : memref<64x512xf32, #tpu.memory_space<any>> -> memref<8x512xf32, #tpu.memory_space<any>>
    %c16_i32_8 = arith.constant 16 : i32
    %c0_i32_9 = arith.constant 0 : i32
    %9 = tpu.memref_slice %arg1[%c16_i32_8, %c0_i32_9] : memref<64x512xf32, #tpu.memory_space<any>> -> memref<8x512xf32, #tpu.memory_space<any>>
    %10 = tpu.memref_slice %arg2[%c2_i32] : memref<8x!tpu.dma_semaphore, #tpu.memory_space<semaphore_mem>> -> memref<1x!tpu.dma_semaphore, #tpu.memory_space<semaphore_mem>>
    %11 = tpu.memref_squeeze %10 : memref<1x!tpu.dma_semaphore, #tpu.memory_space<semaphore_mem>> -> memref<!tpu.dma_semaphore, #tpu.memory_space<semaphore_mem>>
    tpu.enqueue_dma source(%8 : memref<8x512xf32, #tpu.memory_space<any>>) target(%9 : memref<8x512xf32, #tpu.memory_space<any>>) target_semaphore(%11 : memref<!tpu.dma_semaphore, #tpu.memory_space<semaphore_mem>>)
    %c3_i32 = arith.constant 3 : i32
    %c24_i32 = arith.constant 24 : i32
    %c0_i32_10 = arith.constant 0 : i32
    %12 = tpu.memref_slice %arg0[%c24_i32, %c0_i32_10] : memref<64x512xf32, #tpu.memory_space<any>> -> memref<8x512xf32, #tpu.memory_space<any>>
    %c24_i32_11 = arith.constant 24 : i32
    %c0_i32_12 = arith.constant 0 : i32
    %13 = tpu.memref_slice %arg1[%c24_i32_11, %c0_i32_12] : memref<64x512xf32, #tpu.memory_space<any>> -> memref<8x512xf32, #tpu.memory_space<any>>
    %14 = tpu.memref_slice %arg2[%c3_i32] : memref<8x!tpu.dma_semaphore, #tpu.memory_space<semaphore_mem>> -> memref<1x!tpu.dma_semaphore, #tpu.memory_space<semaphore_mem>>
    %15 = tpu.memref_squeeze %14 : memref<1x!tpu.dma_semaphore, #tpu.memory_space<semaphore_mem>> -> memref<!tpu.dma_semaphore, #tpu.memory_space<semaphore_mem>>
    tpu.enqueue_dma source(%12 : memref<8x512xf32, #tpu.memory_space<any>>) target(%13 : memref<8x512xf32, #tpu.memory_space<any>>) target_semaphore(%15 : memref<!tpu.dma_semaphore, #tpu.memory_space<semaphore_mem>>)
    %c4_i32 = arith.constant 4 : i32
    %c32_i32 = arith.constant 32 : i32
    %c0_i32_13 = arith.constant 0 : i32
    %16 = tpu.memref_slice %arg0[%c32_i32, %c0_i32_13] : memref<64x512xf32, #tpu.memory_space<any>> -> memref<8x512xf32, #tpu.memory_space<any>>
    %c32_i32_14 = arith.constant 32 : i32
    %c0_i32_15 = arith.constant 0 : i32
    %17 = tpu.memref_slice %arg1[%c32_i32_14, %c0_i32_15] : memref<64x512xf32, #tpu.memory_space<any>> -> memref<8x512xf32, #tpu.memory_space<any>>
    %18 = tpu.memref_slice %arg2[%c4_i32] : memref<8x!tpu.dma_semaphore, #tpu.memory_space<semaphore_mem>> -> memref<1x!tpu.dma_semaphore, #tpu.memory_space<semaphore_mem>>
    %19 = tpu.memref_squeeze %18 : memref<1x!tpu.dma_semaphore, #tpu.memory_space<semaphore_mem>> -> memref<!tpu.dma_semaphore, #tpu.memory_space<semaphore_mem>>
    tpu.enqueue_dma source(%16 : memref<8x512xf32, #tpu.memory_space<any>>) target(%17 : memref<8x512xf32, #tpu.memory_space<any>>) target_semaphore(%19 : memref<!tpu.dma_semaphore, #tpu.memory_space<semaphore_mem>>)
    %c5_i32 = arith.constant 5 : i32
    %c40_i32 = arith.constant 40 : i32
    %c0_i32_16 = arith.constant 0 : i32
    %20 = tpu.memref_slice %arg0[%c40_i32, %c0_i32_16] : memref<64x512xf32, #tpu.memory_space<any>> -> memref<8x512xf32, #tpu.memory_space<any>>
    %c40_i32_17 = arith.constant 40 : i32
    %c0_i32_18 = arith.constant 0 : i32
    %21 = tpu.memref_slice %arg1[%c40_i32_17, %c0_i32_18] : memref<64x512xf32, #tpu.memory_space<any>> -> memref<8x512xf32, #tpu.memory_space<any>>
    %22 = tpu.memref_slice %arg2[%c5_i32] : memref<8x!tpu.dma_semaphore, #tpu.memory_space<semaphore_mem>> -> memref<1x!tpu.dma_semaphore, #tpu.memory_space<semaphore_mem>>
    %23 = tpu.memref_squeeze %22 : memref<1x!tpu.dma_semaphore, #tpu.memory_space<semaphore_mem>> -> memref<!tpu.dma_semaphore, #tpu.memory_space<semaphore_mem>>
    tpu.enqueue_dma source(%20 : memref<8x512xf32, #tpu.memory_space<any>>) target(%21 : memref<8x512xf32, #tpu.memory_space<any>>) target_semaphore(%23 : memref<!tpu.dma_semaphore, #tpu.memory_space<semaphore_mem>>)
    %c6_i32 = arith.constant 6 : i32
    %c48_i32 = arith.constant 48 : i32
    %c0_i32_19 = arith.constant 0 : i32
    %24 = tpu.memref_slice %arg0[%c48_i32, %c0_i32_19] : memref<64x512xf32, #tpu.memory_space<any>> -> memref<8x512xf32, #tpu.memory_space<any>>
    %c48_i32_20 = arith.constant 48 : i32
    %c0_i32_21 = arith.constant 0 : i32
    %25 = tpu.memref_slice %arg1[%c48_i32_20, %c0_i32_21] : memref<64x512xf32, #tpu.memory_space<any>> -> memref<8x512xf32, #tpu.memory_space<any>>
    %26 = tpu.memref_slice %arg2[%c6_i32] : memref<8x!tpu.dma_semaphore, #tpu.memory_space<semaphore_mem>> -> memref<1x!tpu.dma_semaphore, #tpu.memory_space<semaphore_mem>>
    %27 = tpu.memref_squeeze %26 : memref<1x!tpu.dma_semaphore, #tpu.memory_space<semaphore_mem>> -> memref<!tpu.dma_semaphore, #tpu.memory_space<semaphore_mem>>
    tpu.enqueue_dma source(%24 : memref<8x512xf32, #tpu.memory_space<any>>) target(%25 : memref<8x512xf32, #tpu.memory_space<any>>) target_semaphore(%27 : memref<!tpu.dma_semaphore, #tpu.memory_space<semaphore_mem>>)
    %c7_i32 = arith.constant 7 : i32
    %c56_i32 = arith.constant 56 : i32
    %c0_i32_22 = arith.constant 0 : i32
    %28 = tpu.memref_slice %arg0[%c56_i32, %c0_i32_22] : memref<64x512xf32, #tpu.memory_space<any>> -> memref<8x512xf32, #tpu.memory_space<any>>
    %c56_i32_23 = arith.constant 56 : i32
    %c0_i32_24 = arith.constant 0 : i32
    %29 = tpu.memref_slice %arg1[%c56_i32_23, %c0_i32_24] : memref<64x512xf32, #tpu.memory_space<any>> -> memref<8x512xf32, #tpu.memory_space<any>>
    %30 = tpu.memref_slice %arg2[%c7_i32] : memref<8x!tpu.dma_semaphore, #tpu.memory_space<semaphore_mem>> -> memref<1x!tpu.dma_semaphore, #tpu.memory_space<semaphore_mem>>
    %31 = tpu.memref_squeeze %30 : memref<1x!tpu.dma_semaphore, #tpu.memory_space<semaphore_mem>> -> memref<!tpu.dma_semaphore, #tpu.memory_space<semaphore_mem>>
    tpu.enqueue_dma source(%28 : memref<8x512xf32, #tpu.memory_space<any>>) target(%29 : memref<8x512xf32, #tpu.memory_space<any>>) target_semaphore(%31 : memref<!tpu.dma_semaphore, #tpu.memory_space<semaphore_mem>>)
    %c0_i32_25 = arith.constant 0 : i32
    %c0_i32_26 = arith.constant 0 : i32
    %c0_i32_27 = arith.constant 0 : i32
    %32 = tpu.memref_slice %arg0[%c0_i32_26, %c0_i32_27] : memref<64x512xf32, #tpu.memory_space<any>> -> memref<8x512xf32, #tpu.memory_space<any>>
    %c0_i32_28 = arith.constant 0 : i32
    %c0_i32_29 = arith.constant 0 : i32
    %33 = tpu.memref_slice %arg1[%c0_i32_28, %c0_i32_29] : memref<64x512xf32, #tpu.memory_space<any>> -> memref<8x512xf32, #tpu.memory_space<any>>
    %34 = tpu.memref_slice %arg2[%c0_i32_25] : memref<8x!tpu.dma_semaphore, #tpu.memory_space<semaphore_mem>> -> memref<1x!tpu.dma_semaphore, #tpu.memory_space<semaphore_mem>>
    %35 = tpu.memref_squeeze %34 : memref<1x!tpu.dma_semaphore, #tpu.memory_space<semaphore_mem>> -> memref<!tpu.dma_semaphore, #tpu.memory_space<semaphore_mem>>
    tpu.wait_dma2 semaphore(%35 : memref<!tpu.dma_semaphore, #tpu.memory_space<semaphore_mem>>) src(%32 : memref<8x512xf32, #tpu.memory_space<any>>) dst(%33 : memref<8x512xf32, #tpu.memory_space<any>>)
    %c1_i32_30 = arith.constant 1 : i32
    %c8_i32_31 = arith.constant 8 : i32
    %c0_i32_32 = arith.constant 0 : i32
    %36 = tpu.memref_slice %arg0[%c8_i32_31, %c0_i32_32] : memref<64x512xf32, #tpu.memory_space<any>> -> memref<8x512xf32, #tpu.memory_space<any>>
    %c8_i32_33 = arith.constant 8 : i32
    %c0_i32_34 = arith.constant 0 : i32
    %37 = tpu.memref_slice %arg1[%c8_i32_33, %c0_i32_34] : memref<64x512xf32, #tpu.memory_space<any>> -> memref<8x512xf32, #tpu.memory_space<any>>
    %38 = tpu.memref_slice %arg2[%c1_i32_30] : memref<8x!tpu.dma_semaphore, #tpu.memory_space<semaphore_mem>> -> memref<1x!tpu.dma_semaphore, #tpu.memory_space<semaphore_mem>>
    %39 = tpu.memref_squeeze %38 : memref<1x!tpu.dma_semaphore, #tpu.memory_space<semaphore_mem>> -> memref<!tpu.dma_semaphore, #tpu.memory_space<semaphore_mem>>
    tpu.wait_dma2 semaphore(%39 : memref<!tpu.dma_semaphore, #tpu.memory_space<semaphore_mem>>) src(%36 : memref<8x512xf32, #tpu.memory_space<any>>) dst(%37 : memref<8x512xf32, #tpu.memory_space<any>>)
    %c2_i32_35 = arith.constant 2 : i32
    %c16_i32_36 = arith.constant 16 : i32
    %c0_i32_37 = arith.constant 0 : i32
    %40 = tpu.memref_slice %arg0[%c16_i32_36, %c0_i32_37] : memref<64x512xf32, #tpu.memory_space<any>> -> memref<8x512xf32, #tpu.memory_space<any>>
    %c16_i32_38 = arith.constant 16 : i32
    %c0_i32_39 = arith.constant 0 : i32
    %41 = tpu.memref_slice %arg1[%c16_i32_38, %c0_i32_39] : memref<64x512xf32, #tpu.memory_space<any>> -> memref<8x512xf32, #tpu.memory_space<any>>
    %42 = tpu.memref_slice %arg2[%c2_i32_35] : memref<8x!tpu.dma_semaphore, #tpu.memory_space<semaphore_mem>> -> memref<1x!tpu.dma_semaphore, #tpu.memory_space<semaphore_mem>>
    %43 = tpu.memref_squeeze %42 : memref<1x!tpu.dma_semaphore, #tpu.memory_space<semaphore_mem>> -> memref<!tpu.dma_semaphore, #tpu.memory_space<semaphore_mem>>
    tpu.wait_dma2 semaphore(%43 : memref<!tpu.dma_semaphore, #tpu.memory_space<semaphore_mem>>) src(%40 : memref<8x512xf32, #tpu.memory_space<any>>) dst(%41 : memref<8x512xf32, #tpu.memory_space<any>>)
    %c3_i32_40 = arith.constant 3 : i32
    %c24_i32_41 = arith.constant 24 : i32
    %c0_i32_42 = arith.constant 0 : i32
    %44 = tpu.memref_slice %arg0[%c24_i32_41, %c0_i32_42] : memref<64x512xf32, #tpu.memory_space<any>> -> memref<8x512xf32, #tpu.memory_space<any>>
    %c24_i32_43 = arith.constant 24 : i32
    %c0_i32_44 = arith.constant 0 : i32
    %45 = tpu.memref_slice %arg1[%c24_i32_43, %c0_i32_44] : memref<64x512xf32, #tpu.memory_space<any>> -> memref<8x512xf32, #tpu.memory_space<any>>
    %46 = tpu.memref_slice %arg2[%c3_i32_40] : memref<8x!tpu.dma_semaphore, #tpu.memory_space<semaphore_mem>> -> memref<1x!tpu.dma_semaphore, #tpu.memory_space<semaphore_mem>>
    %47 = tpu.memref_squeeze %46 : memref<1x!tpu.dma_semaphore, #tpu.memory_space<semaphore_mem>> -> memref<!tpu.dma_semaphore, #tpu.memory_space<semaphore_mem>>
    tpu.wait_dma2 semaphore(%47 : memref<!tpu.dma_semaphore, #tpu.memory_space<semaphore_mem>>) src(%44 : memref<8x512xf32, #tpu.memory_space<any>>) dst(%45 : memref<8x512xf32, #tpu.memory_space<any>>)
    %c4_i32_45 = arith.constant 4 : i32
    %c32_i32_46 = arith.constant 32 : i32
    %c0_i32_47 = arith.constant 0 : i32
    %48 = tpu.memref_slice %arg0[%c32_i32_46, %c0_i32_47] : memref<64x512xf32, #tpu.memory_space<any>> -> memref<8x512xf32, #tpu.memory_space<any>>
    %c32_i32_48 = arith.constant 32 : i32
    %c0_i32_49 = arith.constant 0 : i32
    %49 = tpu.memref_slice %arg1[%c32_i32_48, %c0_i32_49] : memref<64x512xf32, #tpu.memory_space<any>> -> memref<8x512xf32, #tpu.memory_space<any>>
    %50 = tpu.memref_slice %arg2[%c4_i32_45] : memref<8x!tpu.dma_semaphore, #tpu.memory_space<semaphore_mem>> -> memref<1x!tpu.dma_semaphore, #tpu.memory_space<semaphore_mem>>
    %51 = tpu.memref_squeeze %50 : memref<1x!tpu.dma_semaphore, #tpu.memory_space<semaphore_mem>> -> memref<!tpu.dma_semaphore, #tpu.memory_space<semaphore_mem>>
    tpu.wait_dma2 semaphore(%51 : memref<!tpu.dma_semaphore, #tpu.memory_space<semaphore_mem>>) src(%48 : memref<8x512xf32, #tpu.memory_space<any>>) dst(%49 : memref<8x512xf32, #tpu.memory_space<any>>)
    %c5_i32_50 = arith.constant 5 : i32
    %c40_i32_51 = arith.constant 40 : i32
    %c0_i32_52 = arith.constant 0 : i32
    %52 = tpu.memref_slice %arg0[%c40_i32_51, %c0_i32_52] : memref<64x512xf32, #tpu.memory_space<any>> -> memref<8x512xf32, #tpu.memory_space<any>>
    %c40_i32_53 = arith.constant 40 : i32
    %c0_i32_54 = arith.constant 0 : i32
    %53 = tpu.memref_slice %arg1[%c40_i32_53, %c0_i32_54] : memref<64x512xf32, #tpu.memory_space<any>> -> memref<8x512xf32, #tpu.memory_space<any>>
    %54 = tpu.memref_slice %arg2[%c5_i32_50] : memref<8x!tpu.dma_semaphore, #tpu.memory_space<semaphore_mem>> -> memref<1x!tpu.dma_semaphore, #tpu.memory_space<semaphore_mem>>
    %55 = tpu.memref_squeeze %54 : memref<1x!tpu.dma_semaphore, #tpu.memory_space<semaphore_mem>> -> memref<!tpu.dma_semaphore, #tpu.memory_space<semaphore_mem>>
    tpu.wait_dma2 semaphore(%55 : memref<!tpu.dma_semaphore, #tpu.memory_space<semaphore_mem>>) src(%52 : memref<8x512xf32, #tpu.memory_space<any>>) dst(%53 : memref<8x512xf32, #tpu.memory_space<any>>)
    %c6_i32_55 = arith.constant 6 : i32
    %c48_i32_56 = arith.constant 48 : i32
    %c0_i32_57 = arith.constant 0 : i32
    %56 = tpu.memref_slice %arg0[%c48_i32_56, %c0_i32_57] : memref<64x512xf32, #tpu.memory_space<any>> -> memref<8x512xf32, #tpu.memory_space<any>>
    %c48_i32_58 = arith.constant 48 : i32
    %c0_i32_59 = arith.constant 0 : i32
    %57 = tpu.memref_slice %arg1[%c48_i32_58, %c0_i32_59] : memref<64x512xf32, #tpu.memory_space<any>> -> memref<8x512xf32, #tpu.memory_space<any>>
    %58 = tpu.memref_slice %arg2[%c6_i32_55] : memref<8x!tpu.dma_semaphore, #tpu.memory_space<semaphore_mem>> -> memref<1x!tpu.dma_semaphore, #tpu.memory_space<semaphore_mem>>
    %59 = tpu.memref_squeeze %58 : memref<1x!tpu.dma_semaphore, #tpu.memory_space<semaphore_mem>> -> memref<!tpu.dma_semaphore, #tpu.memory_space<semaphore_mem>>
    tpu.wait_dma2 semaphore(%59 : memref<!tpu.dma_semaphore, #tpu.memory_space<semaphore_mem>>) src(%56 : memref<8x512xf32, #tpu.memory_space<any>>) dst(%57 : memref<8x512xf32, #tpu.memory_space<any>>)
    %c7_i32_60 = arith.constant 7 : i32
    %c56_i32_61 = arith.constant 56 : i32
    %c0_i32_62 = arith.constant 0 : i32
    %60 = tpu.memref_slice %arg0[%c56_i32_61, %c0_i32_62] : memref<64x512xf32, #tpu.memory_space<any>> -> memref<8x512xf32, #tpu.memory_space<any>>
    %c56_i32_63 = arith.constant 56 : i32
    %c0_i32_64 = arith.constant 0 : i32
    %61 = tpu.memref_slice %arg1[%c56_i32_63, %c0_i32_64] : memref<64x512xf32, #tpu.memory_space<any>> -> memref<8x512xf32, #tpu.memory_space<any>>
    %62 = tpu.memref_slice %arg2[%c7_i32_60] : memref<8x!tpu.dma_semaphore, #tpu.memory_space<semaphore_mem>> -> memref<1x!tpu.dma_semaphore, #tpu.memory_space<semaphore_mem>>
    %63 = tpu.memref_squeeze %62 : memref<1x!tpu.dma_semaphore, #tpu.memory_space<semaphore_mem>> -> memref<!tpu.dma_semaphore, #tpu.memory_space<semaphore_mem>>
    tpu.wait_dma2 semaphore(%63 : memref<!tpu.dma_semaphore, #tpu.memory_space<semaphore_mem>>) src(%60 : memref<8x512xf32, #tpu.memory_space<any>>) dst(%61 : memref<8x512xf32, #tpu.memory_space<any>>)
    return
  }
}

</mosaic_0001>

<llo_original>
// kernel: tpu_custom_call.1
$region0: #{tpu_custom_call.1}
  #allocation0 [shape = 'u32[]', space=smem, size = 0x4, offset = 0x4, fixed_abs, tag = 'smem constant byte address 0x4 - core index']
  #allocation1 [shape = 'u32[144,128]{1,0:T(1,128)}', space=vmem, size = 0x12000, scoped, tag = 'internal scratch']
  #allocation2 [shape = 's32[8]{0}', space=sflag, size = 0x20, scoped, tag = 'scratch operand']
  #allocation3 [shape = 's32[]', space=sflag, size = 0x4, offset = 0, fixed_abs, tag = 'sflag constant byte address 0x0 - dummy sync flag']
  #allocation4 [shape = 'u32[0]{0}', space=smem, size = 0, offset = 0, fixed_abs, tag = 'smem constant byte address 0x0 - null']
  #allocation5 [shape = 's32[]', space=sflag, size = 0x4, offset = 0, fixed_abs, tag = 'sflag constant byte address 0x0 - dummy sync flag']
  #allocation6 [shape = 'u32[0]{0}', space=smem, size = 0, offset = 0, fixed_abs, tag = 'smem constant byte address 0x0 - null']
  #allocation7 [shape = 's32[]', space=sflag, size = 0x4, offset = 0, fixed_abs, tag = 'sflag constant byte address 0x0 - dummy sync flag']
  #allocation8 [shape = 'u32[0]{0}', space=smem, size = 0, offset = 0, fixed_abs, tag = 'smem constant byte address 0x0 - null']
  #allocation9 [shape = 's32[]', space=sflag, size = 0x4, offset = 0, fixed_abs, tag = 'sflag constant byte address 0x0 - dummy sync flag']
  #allocation10 [shape = 'u32[0]{0}', space=smem, size = 0, offset = 0, fixed_abs, tag = 'smem constant byte address 0x0 - null']
  #allocation11 [shape = 's32[]', space=sflag, size = 0x4, offset = 0, fixed_abs, tag = 'sflag constant byte address 0x0 - dummy sync flag']
  #allocation12 [shape = 'u32[0]{0}', space=smem, size = 0, offset = 0, fixed_abs, tag = 'smem constant byte address 0x0 - null']
  #allocation13 [shape = 's32[]', space=sflag, size = 0x4, offset = 0, fixed_abs, tag = 'sflag constant byte address 0x0 - dummy sync flag']
  #allocation14 [shape = 'u32[0]{0}', space=smem, size = 0, offset = 0, fixed_abs, tag = 'smem constant byte address 0x0 - null']
  #allocation15 [shape = 's32[]', space=sflag, size = 0x4, offset = 0, fixed_abs, tag = 'sflag constant byte address 0x0 - dummy sync flag']
  #allocation16 [shape = 'u32[0]{0}', space=smem, size = 0, offset = 0, fixed_abs, tag = 'smem constant byte address 0x0 - null']
  #allocation17 [shape = 's32[]', space=sflag, size = 0x4, offset = 0, fixed_abs, tag = 'sflag constant byte address 0x0 - dummy sync flag']
  #allocation18 [shape = 'u32[0]{0}', space=smem, size = 0, offset = 0, fixed_abs, tag = 'smem constant byte address 0x0 - null']
  %s0 = inlined_call_operand.hbm [shape: f32[64,512], index: 0, kind: input, shape index: {}]
  %s1 = inlined_call_operand.hbm [shape: f32[64,512], index: 1, kind: output, shape index: {}]
  %s2 = sld [smem:[#allocation0]]
  $region2: #{tpu_custom_call.1} parent=0
    _
  %s4 = ssub.s32 1, %s2
  %s5 = scalar_select 0, %s4, %s2
  %s7 = sshll.u32 1, 14
  %s8 = sxor.u32 4294967295, %s7
  %12 = dma.general %s0, 512, %s1, [#allocation2], 131072, [#allocation4], 0, 0
  %s13 = scalar_lea.hbm %s0, 512
  %s14 = scalar_lea.hbm %s1, 512
  %s15 = scalar_lea.sflag [#allocation2], 1
  %s17 = sshll.u32 1, 14
  %s18 = sxor.u32 4294967295, %s17
  %22 = dma.general %s13, 512, %s14, %s15, 131072, [#allocation6], 0, 0
  %s23 = scalar_lea.hbm %s0, 1024
  %s24 = scalar_lea.hbm %s1, 1024
  %s25 = scalar_lea.sflag [#allocation2], 2
  %s27 = sshll.u32 1, 14
  %s28 = sxor.u32 4294967295, %s27
  %32 = dma.general %s23, 512, %s24, %s25, 131072, [#allocation8], 0, 0
  %s33 = scalar_lea.hbm %s0, 1536
  %s34 = scalar_lea.hbm %s1, 1536
  %s35 = scalar_lea.sflag [#allocation2], 3
  %s37 = sshll.u32 1, 14
  %s38 = sxor.u32 4294967295, %s37
  %42 = dma.general %s33, 512, %s34, %s35, 131072, [#allocation10], 0, 0
  %s43 = scalar_lea.hbm %s0, 2048
  %s44 = scalar_lea.hbm %s1, 2048
  %s45 = scalar_lea.sflag [#allocation2], 4
  %s47 = sshll.u32 1, 14
  %s48 = sxor.u32 4294967295, %s47
  %52 = dma.general %s43, 512, %s44, %s45, 131072, [#allocation12], 0, 0
  %s53 = scalar_lea.hbm %s0, 2560
  %s54 = scalar_lea.hbm %s1, 2560
  %s55 = scalar_lea.sflag [#allocation2], 5
  %s57 = sshll.u32 1, 14
  %s58 = sxor.u32 4294967295, %s57
  %62 = dma.general %s53, 512, %s54, %s55, 131072, [#allocation14], 0, 0
  %s63 = scalar_lea.hbm %s0, 3072
  %s64 = scalar_lea.hbm %s1, 3072
  %s65 = scalar_lea.sflag [#allocation2], 6
  %s67 = sshll.u32 1, 14
  %s68 = sxor.u32 4294967295, %s67
  %72 = dma.general %s63, 512, %s64, %s65, 131072, [#allocation16], 0, 0
  %s73 = scalar_lea.hbm %s0, 3584
  %s74 = scalar_lea.hbm %s1, 3584
  %s75 = scalar_lea.sflag [#allocation2], 7
  %s77 = sshll.u32 1, 14
  %s78 = sxor.u32 4294967295, %s77
  %82 = dma.general %s73, 512, %s74, %s75, 131072, [#allocation18], 0, 0
  %s83 = smul.u32 8, 1
  %s84 = smul.u32 %s83, 4
  %s85 = sshll.u32 %s84, 4
  %86 = dma.done [#allocation2], %s85
  %s87 = sshll.u32 %s84, 4
  %88 = dma.done %s15, %s87
  %s89 = sshll.u32 %s84, 4
  %90 = dma.done %s25, %s89
  %s91 = sshll.u32 %s84, 4
  %92 = dma.done %s35, %s91
  %s93 = sshll.u32 %s84, 4
  %94 = dma.done %s45, %s93
  %s95 = sshll.u32 %s84, 4
  %96 = dma.done %s55, %s95
  %s97 = sshll.u32 %s84, 4
  %98 = dma.done %s65, %s97
  %s99 = sshll.u32 %s84, 4
  %100 = dma.done %s75, %s99
  %101 = vsyncmov [#allocation2]
  %s102 = vpop.sfrf %101
  %p103 = scmp.eq.s32.totalorder %s102, 0
  %p104 = pneg %p103
  %106 = shalt.err (%p104)
  %s107 = scalar_lea.sflag [#allocation2], 1
  %108 = vsyncmov %s107
  %s109 = vpop.sfrf %108
  %p110 = scmp.eq.s32.totalorder %s109, 0
  %p111 = pneg %p110
  %113 = shalt.err (%p111)
  %s114 = scalar_lea.sflag [#allocation2], 2
  %115 = vsyncmov %s114
  %s116 = vpop.sfrf %115
  %p117 = scmp.eq.s32.totalorder %s116, 0
  %p118 = pneg %p117
  %120 = shalt.err (%p118)
  %s121 = scalar_lea.sflag [#allocation2], 3
  %122 = vsyncmov %s121
  %s123 = vpop.sfrf %122
  %p124 = scmp.eq.s32.totalorder %s123, 0
  %p125 = pneg %p124
  %127 = shalt.err (%p125)
  %s128 = scalar_lea.sflag [#allocation2], 4
  %129 = vsyncmov %s128
  %s130 = vpop.sfrf %129
  %p131 = scmp.eq.s32.totalorder %s130, 0
  %p132 = pneg %p131
  %134 = shalt.err (%p132)
  %s135 = scalar_lea.sflag [#allocation2], 5
  %136 = vsyncmov %s135
  %s137 = vpop.sfrf %136
  %p138 = scmp.eq.s32.totalorder %s137, 0
  %p139 = pneg %p138
  %141 = shalt.err (%p139)
  %s142 = scalar_lea.sflag [#allocation2], 6
  %143 = vsyncmov %s142
  %s144 = vpop.sfrf %143
  %p145 = scmp.eq.s32.totalorder %s144, 0
  %p146 = pneg %p145
  %148 = shalt.err (%p146)
  %s149 = scalar_lea.sflag [#allocation2], 7
  %150 = vsyncmov %s149
  %s151 = vpop.sfrf %150
  %p152 = scmp.eq.s32.totalorder %s151, 0
  %p153 = pneg %p152
  %155 = shalt.err (%p153)

</llo_original>
